<compile_context>
chip_gen: v7x
topology: tpu7x:2x2x1
jax: 0.10.0
libtpu: 0.0.40
codegen_flags: <defaults>
</compile_context>

<pallas_src>
import functools

import jax
import jax.numpy as jnp
from jax.experimental import pallas as pl
from jax.experimental.pallas import tpu as pltpu

HIDDEN = 16  # my_Net hidden width


def _round_up(n, m):
    return ((n + m - 1) // m) * m


def mlp_kernel(p_ref, x_ref, o_ref, *, in_dim, out_dim, r_w2, r_w3, r_b):
    """One batch tile. x_ref: (TB, in_dim); o_ref: (TB, out_dim).

    p_ref is the packed parameter slab (constant index_map -> VMEM-resident
    across the whole grid).  All slices below are static ref views (free).
    Weights are stored pre-transposed (in_features, out_features) so the
    PyTorch semantics x @ W^T + b become plain jnp.dot's.
    """
    x = x_ref[...]                                        # (TB, in_dim)

    w1t = p_ref[0:in_dim, 0:HIDDEN]                       # (in_dim, 16)
    w2t = p_ref[r_w2:r_w2 + HIDDEN, 0:HIDDEN]             # (16, 16)
    w3t = p_ref[r_w3:r_w3 + HIDDEN, 0:out_dim]            # (16, out_dim)
    b1 = p_ref[r_b + 0:r_b + 1, 0:HIDDEN]                 # (1, 16)
    b2 = p_ref[r_b + 1:r_b + 2, 0:HIDDEN]                 # (1, 16)
    b3 = p_ref[r_b + 2:r_b + 3, 0:out_dim]                # (1, out_dim)

    h1 = jnp.maximum(
        jnp.dot(x, w1t, preferred_element_type=jnp.float32) + b1, 0.0)
    h2 = jnp.maximum(
        jnp.dot(h1, w2t, preferred_element_type=jnp.float32) + b2, 0.0)
    o_ref[...] = jnp.dot(h2, w3t, preferred_element_type=jnp.float32) + b3


def pack_params(params):
    """Pack w1,b1,w2,b2,w3,b3 (PyTorch layout) into one f32 slab.

    Layout (rows, all starts sublane-aligned where it matters):
      [0, in_dim)        cols [0,16)       : w1^T  (in_dim, 16)
      [r_w2, r_w2+16)    cols [0,16)       : w2^T  (16, 16)
      [r_w3, r_w3+16)    cols [0,out_dim)  : w3^T  (16, out_dim)
      row r_b            cols [0,16)       : b1
      row r_b+1          cols [0,16)       : b2
      row r_b+2          cols [0,out_dim)  : b3
    """
    w1, b1 = params["w1"], params["b1"]          # (16, in), (16,)
    w2, b2 = params["w2"], params["b2"]          # (16, 16), (16,)
    w3, b3 = params["w3"], params["b3"]          # (out, 16), (out,)
    in_dim = w1.shape[1]
    out_dim = w3.shape[0]

    cols = max(HIDDEN, out_dim)
    r_w2 = _round_up(in_dim, 8)
    r_w3 = r_w2 + HIDDEN
    r_b = r_w3 + HIDDEN
    rows = _round_up(r_b + 3, 8)

    p = jnp.zeros((rows, cols), jnp.float32)
    p = p.at[0:in_dim, 0:HIDDEN].set(jnp.asarray(w1, jnp.float32).T)
    p = p.at[r_w2:r_w2 + HIDDEN, 0:HIDDEN].set(jnp.asarray(w2, jnp.float32).T)
    p = p.at[r_w3:r_w3 + HIDDEN, 0:out_dim].set(jnp.asarray(w3, jnp.float32).T)
    p = p.at[r_b + 0, 0:HIDDEN].set(jnp.asarray(b1, jnp.float32))
    p = p.at[r_b + 1, 0:HIDDEN].set(jnp.asarray(b2, jnp.float32))
    p = p.at[r_b + 2, 0:out_dim].set(jnp.asarray(b3, jnp.float32))
    return p, dict(r_w2=r_w2, r_w3=r_w3, r_b=r_b)


def my_net_forward(x, params, tb=512):
    """x: (B, in_dim) f32; params in PyTorch layout. Returns (B, out_dim) f32."""
    B, in_dim = x.shape
    out_dim = params["w3"].shape[0]

    packed, offs = pack_params(params)

    # One grid step for small batches; tiles aligned to 256 (v6e/v7x MXU width)
    # and therefore to 8 sublanes.  No host-side padding: Pallas masks the
    # partial edge block (there is no cross-batch mixing in the kernel, so the
    # garbage pad rows never reach the real output rows).
    tb = max(256, min(_round_up(tb, 256), _round_up(B, 256)))
    grid = (pl.cdiv(B, tb),)

    kernel = functools.partial(
        mlp_kernel, in_dim=in_dim, out_dim=out_dim, **offs)

    cost = pl.CostEstimate(
        flops=2 * B * (in_dim * HIDDEN + HIDDEN * HIDDEN + HIDDEN * out_dim),
        transcendentals=0,
        bytes_accessed=4 * (B * in_dim + packed.size + B * out_dim),
    )

    out = pl.pallas_call(
        kernel,
        out_shape=jax.ShapeDtypeStruct((B, out_dim), jnp.float32),
        grid=grid,
        in_specs=[
            # Packed weights/biases: constant index_map -> single DMA, VMEM-resident.
            pl.BlockSpec(packed.shape, lambda i: (0, 0)),
            # Streamed batch tile of the input.
            pl.BlockSpec((tb, in_dim), lambda i: (i, 0)),
        ],
        out_specs=pl.BlockSpec((tb, out_dim), lambda i: (i, 0)),
        compiler_params=pltpu.CompilerParams(
            # Trivial per-tile work: keep it on one TensorCore (v7x advice).
            dimension_semantics=("arbitrary",)),
        cost_estimate=cost,
    )(packed, x.astype(jnp.float32))

    return out


# ---------------- parameter init (matches my_Net.__init__) ----------------

def xavier_uniform(key, out_f, in_f):
    # torch.nn.init.xavier_uniform_ (gain=1); weight shape (out_features, in_features)
    limit = jnp.sqrt(6.0 / (in_f + out_f))
    return jax.random.uniform(key, (out_f, in_f), jnp.float32, -limit, limit)


def linear_bias_init(key, out_f, in_f):
    # PyTorch nn.Linear default bias init: U(-1/sqrt(fan_in), 1/sqrt(fan_in))
    bound = 1.0 / jnp.sqrt(jnp.float32(in_f))
    return jax.random.uniform(key, (out_f,), jnp.float32, -bound, bound)


def init_params(key, in_dim, out_dim, hidden=HIDDEN):
    k = jax.random.split(key, 6)
    return {
        "w1": xavier_uniform(k[0], hidden, in_dim),
        "b1": linear_bias_init(k[1], hidden, in_dim),
        "w2": xavier_uniform(k[2], hidden, hidden),
        "b2": linear_bias_init(k[3], hidden, hidden),
        "w3": xavier_uniform(k[4], out_dim, hidden),
        "b3": linear_bias_init(k[5], out_dim, hidden),
    }


if __name__ == "__main__":
    key = jax.random.PRNGKey(0)
    in_dim, out_dim = 4, 2      # typical DQN state/action dims (CartPole)
    batch = 200                 # not a multiple of 256: exercises the partial edge block

    kx, kp = jax.random.split(key)
    x = jax.random.normal(kx, (batch, in_dim), jnp.float32)
    params = init_params(kp, in_dim, out_dim)

    fwd = jax.jit(my_net_forward)   # packing + kernel under one dispatch
    out = jax.block_until_ready(fwd(x, params))

    # pure-JAX reference (PyTorch semantics: x @ W^T + b)
    def ref(x, p):
        h1 = jnp.maximum(x @ p["w1"].T + p["b1"], 0.0)
        h2 = jnp.maximum(h1 @ p["w2"].T + p["b2"], 0.0)
        return h2 @ p["w3"].T + p["b3"]

    expected = ref(x, params)
    assert out.shape == (batch, out_dim)
    assert jnp.allclose(out, expected, atol=1e-5, rtol=1e-5)

    print("KERNEL_OK")
</pallas_src>

<mosaic_0001>
module attributes {stable_mosaic.version = 11 : i64} {
  func.func @mlp_kernel(%arg0: i32, %arg1: memref<48x16xf32, #tpu.memory_space<vmem>>, %arg2: memref<256x4xf32, #tpu.memory_space<vmem>>, %arg3: memref<256x2xf32, #tpu.memory_space<vmem>>) attributes {dimension_semantics = [#tpu.dimension_semantics<arbitrary>], iteration_bounds = array<i64: 1>, scalar_prefetch = 0 : i64, scratch_operands = 0 : i64, tpu.core_type = #tpu.core_type<tc>, window_params = [{pipeline_mode = #tpu.pipeline_mode<synchronous>, transform_indices = @transform_0, window_bounds = array<i64: 48, 16>}, {transform_indices = @transform_1, window_bounds = array<i64: 256, 4>}, {transform_indices = @transform_2, window_bounds = array<i64: 256, 2>}]} {
    %c0 = arith.constant 0 : index
    %c0_0 = arith.constant 0 : index
    %0 = vector.load %arg2[%c0, %c0_0] : memref<256x4xf32, #tpu.memory_space<vmem>>, vector<256x4xf32>
    %c0_1 = arith.constant 0 : index
    %c0_2 = arith.constant 0 : index
    %1 = vector.load %arg1[%c0_1, %c0_2] : memref<48x16xf32, #tpu.memory_space<vmem>>, vector<4x16xf32>
    %c8 = arith.constant 8 : index
    %c0_3 = arith.constant 0 : index
    %2 = vector.load %arg1[%c8, %c0_3] : memref<48x16xf32, #tpu.memory_space<vmem>>, vector<16x16xf32>
    %c24 = arith.constant 24 : index
    %c0_4 = arith.constant 0 : index
    %3 = vector.load %arg1[%c24, %c0_4] : memref<48x16xf32, #tpu.memory_space<vmem>>, vector<16x2xf32>
    %c40 = arith.constant 40 : index
    %c0_5 = arith.constant 0 : index
    %4 = vector.load %arg1[%c40, %c0_5] : memref<48x16xf32, #tpu.memory_space<vmem>>, vector<1x16xf32>
    %c41 = arith.constant 41 : index
    %c0_6 = arith.constant 0 : index
    %5 = vector.load %arg1[%c41, %c0_6] : memref<48x16xf32, #tpu.memory_space<vmem>>, vector<1x16xf32>
    %c42 = arith.constant 42 : index
    %c0_7 = arith.constant 0 : index
    %6 = vector.load %arg1[%c42, %c0_7] : memref<48x16xf32, #tpu.memory_space<vmem>>, vector<1x2xf32>
    %cst = arith.constant dense<0.000000e+00> : vector<256x16xf32>
    %7 = tpu.matmul %0, %1, %cst {dimension_numbers = #tpu.dot_dimension_numbers<[1], [0], [0], [1], [0, 0, 1, 1], [], []>} : vector<256x4xf32>, vector<4x16xf32>, vector<256x16xf32> -> vector<256x16xf32>
    %8 = vector.broadcast %4 : vector<1x16xf32> to vector<256x16xf32>
    %9 = arith.addf %7, %8 : vector<256x16xf32>
    %cst_8 = arith.constant 0.000000e+00 : f32
    %10 = vector.broadcast %cst_8 : f32 to vector<256x16xf32>
    %11 = arith.maximumf %9, %10 : vector<256x16xf32>
    %cst_9 = arith.constant dense<0.000000e+00> : vector<256x16xf32>
    %12 = tpu.matmul %11, %2, %cst_9 {dimension_numbers = #tpu.dot_dimension_numbers<[1], [0], [0], [1], [0, 0, 1, 1], [], []>} : vector<256x16xf32>, vector<16x16xf32>, vector<256x16xf32> -> vector<256x16xf32>
    %13 = vector.broadcast %5 : vector<1x16xf32> to vector<256x16xf32>
    %14 = arith.addf %12, %13 : vector<256x16xf32>
    %cst_10 = arith.constant 0.000000e+00 : f32
    %15 = vector.broadcast %cst_10 : f32 to vector<256x16xf32>
    %16 = arith.maximumf %14, %15 : vector<256x16xf32>
    %cst_11 = arith.constant dense<0.000000e+00> : vector<256x2xf32>
    %17 = tpu.matmul %16, %3, %cst_11 {dimension_numbers = #tpu.dot_dimension_numbers<[1], [0], [0], [1], [0, 0, 1, 1], [], []>} : vector<256x16xf32>, vector<16x2xf32>, vector<256x2xf32> -> vector<256x2xf32>
    %18 = vector.broadcast %6 : vector<1x2xf32> to vector<256x2xf32>
    %19 = arith.addf %17, %18 : vector<256x2xf32>
    %c0_12 = arith.constant 0 : index
    %c0_13 = arith.constant 0 : index
    %20 = vector.load %arg3[%c0_12, %c0_13] : memref<256x2xf32, #tpu.memory_space<vmem>>, vector<256x2xf32>
    tpu.vector_store %arg3[%c0_12, %c0_13], %19 {strides = array<i32>} : memref<256x2xf32, #tpu.memory_space<vmem>>, vector<256x2xf32>,
    return
  }
  func.func @transform_0(%arg0: i32) -> (i32, i32) {
    %c0_i32 = arith.constant 0 : i32
    %c0_i32_0 = arith.constant 0 : i32
    %c0_i32_1 = arith.constant 0 : i32
    return %c0_i32, %c0_i32_0 : i32, i32
  }
  func.func @transform_1(%arg0: i32) -> (i32, i32) {
    %c0_i32 = arith.constant 0 : i32
    %c0_i32_0 = arith.constant 0 : i32
    return %arg0, %c0_i32 : i32, i32
  }
  func.func @transform_2(%arg0: i32) -> (i32, i32) {
    %c0_i32 = arith.constant 0 : i32
    %c0_i32_0 = arith.constant 0 : i32
    return %arg0, %c0_i32 : i32, i32
  }
}

</mosaic_0001>

<llo_original>
// kernel: my_net_forward.1
$region0: #{my_net_forward.1}
  #allocation0 [shape = 'u32[]', space=smem, size = 0x4, offset = 0x4, fixed_abs, tag = 'smem constant byte address 0x4 - core index']
  #allocation1 [shape = 'u32[144,128]{1,0:T(1,128)}', space=vmem, size = 0x12000, scoped, tag = 'internal scratch']
  %s0 = inlined_call_operand.vmem [shape: f32[48,16], index: 0, kind: input, shape index: {}]
  %s1 = inlined_call_operand.vmem [shape: f32[200,4], index: 1, kind: input, shape index: {}]
  %s2 = inlined_call_operand.vmem [shape: f32[200,2], index: 2, kind: output, shape index: {}]
  %s3 = sld [smem:[#allocation0]]
  $region52: #{my_net_forward.1} parent=0
    _
  %s5 = ssub.s32 1, %s3
  %s6 = scalar_select 0, %s5, %s3
  $region1: #{my_net_forward.1} parent=0
    #allocation2 [shape = 'u8[131072]{0}', space=vmem, size = 0x20000, scoped, tag = 'output window, operand 0, single buffered']
    // Predicated region
    $region2: #{my_net_forward.1} parent=1 // pred_check
      _
    $region3: #{my_net_forward.1} parent=1 // pred_check_branch
      %8 = sbr.rel (0) target = $region5
    $region4: #{my_net_forward.1} parent=1 // pred_region
      _
    $region5: #{my_net_forward.1} parent=1 // pred_fallthru
      _
    // Predicated region
    $region6: #{my_net_forward.1} parent=1 // pred_check
      _
    $region7: #{my_net_forward.1} parent=1 // pred_check_branch
      %10 = sbr.rel (0) target = $region9
    $region8: #{my_net_forward.1} parent=1 // pred_region
      _
    $region9: #{my_net_forward.1} parent=1 // pred_fallthru
      _
    %v11 = vld [vmem:[%s1] sm:$0xff]
    %v12 = vld [vmem:[%s1 + $0x8] sm:$0xff]
    %v13 = vld [vmem:[%s1 + $0x10] sm:$0xff]
    %v14 = vld [vmem:[%s1 + $0x18] sm:$0xff]
    %v15 = vld [vmem:[%s1 + $0x20] sm:$0xff]
    %v16 = vld [vmem:[%s1 + $0x28] sm:$0xff]
    %v17 = vld [vmem:[%s1 + $0x30] sm:$0xff]
    %v18 = vld [vmem:[%s1 + $0x38] sm:$0xff]
    %v19 = vld [vmem:[%s1 + $0x40] sm:$0xff]
    %v20 = vld [vmem:[%s1 + $0x48] sm:$0xff]
    %v21 = vld [vmem:[%s1 + $0x50] sm:$0xff]
    %v22 = vld [vmem:[%s1 + $0x58] sm:$0xff]
    %v23 = vld [vmem:[%s1 + $0x60] sm:$0xff]
    %v24 = vld [vmem:[%s1 + $0x68] sm:$0xff]
    %v25 = vld [vmem:[%s1 + $0x70] sm:$0xff]
    %v26 = vld [vmem:[%s1 + $0x78] sm:$0xff]
    %v27 = vld [vmem:[%s1 + $0x80] sm:$0xff]
    %v28 = vld [vmem:[%s1 + $0x88] sm:$0xff]
    %v29 = vld [vmem:[%s1 + $0x90] sm:$0xff]
    %v30 = vld [vmem:[%s1 + $0x98] sm:$0xff]
    %v31 = vld [vmem:[%s1 + $0xa0] sm:$0xff]
    %v32 = vld [vmem:[%s1 + $0xa8] sm:$0xff]
    %v33 = vld [vmem:[%s1 + $0xb0] sm:$0xff]
    %v34 = vld [vmem:[%s1 + $0xb8] sm:$0xff]
    %v35 = vld [vmem:[%s1 + $0xc0] sm:$0xff]
    %v36 = vld [vmem:[%s1 + $0xc8] sm:$0xff]
    %v37 = vld [vmem:[%s1 + $0xd0] sm:$0xff]
    %v38 = vld [vmem:[%s1 + $0xd8] sm:$0xff]
    %v39 = vld [vmem:[%s1 + $0xe0] sm:$0xff]
    %v40 = vld [vmem:[%s1 + $0xe8] sm:$0xff]
    %v41 = vld [vmem:[%s1 + $0xf0] sm:$0xff]
    %v42 = vld [vmem:[%s1 + $0xf8] sm:$0xff]
    %v43 = vld [vmem:[%s0] sm:$0xf]
    %v44 = vld [vmem:[%s0 + $0x8] sm:$0xff]
    %v45 = vld [vmem:[%s0 + $0x10] sm:$0xff]
    %v46 = vld [vmem:[%s0 + $0x18] sm:$0xff]
    %v47 = vld [vmem:[%s0 + $0x20] sm:$0xff]
    %v48 = vld [vmem:[%s0 + $0x28] sm:$0x1]
    %v49 = vld [vmem:[%s0 + $0x29] sm:$0x1]
    %v50 = vld [vmem:[%s0 + $0x2a] sm:$0x1]
    %v51 = vlaneseq
    %v52 = vshrl.u32 %v51, 7
    %v53 = vsub.s32 0, %v52
    %v54 = vrot.slane %v48, %v53
    %vm55 = vcmask 31744
    %v57 = vsel %vm55, %v11, 0
    %v60 = vsel %vm55, %v12, 0
    %v63 = vsel %vm55, %v13, 0
    %v66 = vsel %vm55, %v14, 0
    %v69 = vsel %vm55, %v15, 0
    %v72 = vsel %vm55, %v16, 0
    %v75 = vsel %vm55, %v17, 0
    %v78 = vsel %vm55, %v18, 0
    %v81 = vsel %vm55, %v19, 0
    %v84 = vsel %vm55, %v20, 0
    %v87 = vsel %vm55, %v21, 0
    %v90 = vsel %vm55, %v22, 0
    %v93 = vsel %vm55, %v23, 0
    %v96 = vsel %vm55, %v24, 0
    %v99 = vsel %vm55, %v25, 0
    %v102 = vsel %vm55, %v26, 0
    %v105 = vsel %vm55, %v27, 0
    %v108 = vsel %vm55, %v28, 0
    %v111 = vsel %vm55, %v29, 0
    %v114 = vsel %vm55, %v30, 0
    %v117 = vsel %vm55, %v31, 0
    %v120 = vsel %vm55, %v32, 0
    %v123 = vsel %vm55, %v33, 0
    %v126 = vsel %vm55, %v34, 0
    %v129 = vsel %vm55, %v35, 0
    %v132 = vsel %vm55, %v36, 0
    %v135 = vsel %vm55, %v37, 0
    %v138 = vsel %vm55, %v38, 0
    %v141 = vsel %vm55, %v39, 0
    %v144 = vsel %vm55, %v40, 0
    %v147 = vsel %vm55, %v41, 0
    %v150 = vsel %vm55, %v42, 0
    %vm152 = vcmask 1043456
    %v154 = vsel %vm152, %v43, 0
    %156 = vmatprep.subr.mxu0 0.0
    %157 = vmatpush1.msra.mxu0 %v154
    %158 = vmatprep.subr.mxu0 0.0
    %159 = vmatpush1.msra.mxu0 0.0
    %160 = vmatprep.subr.mxu0 0.0
    %161 = vmatpush1.msra.mxu0 0.0
    %162 = vmatprep.subr.mxu0 0.0
    %163 = vmatpush1.msra.mxu0 0.0
    %164 = vmatprep.subr.mxu0 0.0
    %165 = vmatpush1.msra.mxu0 0.0
    %166 = vmatprep.subr.mxu0 0.0
    %167 = vmatpush1.msra.mxu0 0.0
    %168 = vmatprep.subr.mxu0 0.0
    %169 = vmatpush1.msra.mxu0 0.0
    %170 = vmatprep.subr.mxu0 0.0
    %171 = vmatpush1.msra.mxu0 0.0
    %172 = vmatprep.subr.mxu0 0.0
    %173 = vmatpush1.msra.mxu0 0.0
    %174 = vmatprep.subr.mxu0 0.0
    %175 = vmatpush1.msra.mxu0 0.0
    %176 = vmatprep.subr.mxu0 0.0
    %177 = vmatpush1.msra.mxu0 0.0
    %178 = vmatprep.subr.mxu0 0.0
    %179 = vmatpush1.msra.mxu0 0.0
    %180 = vmatprep.subr.mxu0 0.0
    %181 = vmatpush1.msra.mxu0 0.0
    %182 = vmatprep.subr.mxu0 0.0
    %183 = vmatpush1.msra.mxu0 0.0
    %184 = vmatprep.subr.mxu0 0.0
    %185 = vmatpush1.msra.mxu0 0.0
    %186 = vmatprep.subr.mxu0 0.0
    %187 = vmatpush1.msra.mxu0 0.0
    %188 = vmatprep.subr.mxu0 0.0
    %189 = vmatpush1.msra.mxu0 0.0
    %190 = vmatprep.subr.mxu0 0.0
    %191 = vmatpush1.msra.mxu0 0.0
    %192 = vmatprep.subr.mxu0 0.0
    %193 = vmatpush1.msra.mxu0 0.0
    %194 = vmatprep.subr.mxu0 0.0
    %195 = vmatpush1.msra.mxu0 0.0
    %196 = vmatprep.subr.mxu0 0.0
    %197 = vmatpush1.msra.mxu0 0.0
    %198 = vmatprep.subr.mxu0 0.0
    %199 = vmatpush1.msra.mxu0 0.0
    %200 = vmatprep.subr.mxu0 0.0
    %201 = vmatpush1.msra.mxu0 0.0
    %202 = vmatprep.subr.mxu0 0.0
    %203 = vmatpush1.msra.mxu0 0.0
    %204 = vmatprep.subr.mxu0 0.0
    %205 = vmatpush1.msra.mxu0 0.0
    %206 = vmatprep.subr.mxu0 0.0
    %207 = vmatpush1.msra.mxu0 0.0
    %208 = vmatprep.subr.mxu0 0.0
    %209 = vmatpush1.msra.mxu0 0.0
    %210 = vmatprep.subr.mxu0 0.0
    %211 = vmatpush1.msra.mxu0 0.0
    %212 = vmatprep.subr.mxu0 0.0
    %213 = vmatpush1.msra.mxu0 0.0
    %214 = vmatprep.subr.mxu0 0.0
    %215 = vmatpush1.msra.mxu0 0.0
    %216 = vmatprep.subr.mxu0 0.0
    %217 = vmatpush1.msra.mxu0 0.0
    %218 = vmatprep.subr.mxu0 0.0
    %219 = vmatpush1.msra.mxu0 0.0
    %220 = vmatprep.mubr.f32.mxu0 0.0
    %221 = vmatmul.mubr.f32.gmra.mrb[0].mxu0 %v57
    %v222 = vpop.f32.mrb[0].mxu0
    %v223 = vadd.f32 %v54, %v222
    %v224 = vpop.f32.mrb[0].mxu0
    %225 = vmatprep.mubr.f32.mxu0 0.0
    %226 = vmatmul.mubr.f32.gmra.mrb[0].mxu0 %v60
    %v227 = vpop.f32.mrb[0].mxu0
    %v228 = vadd.f32 %v54, %v227
    %v229 = vpop.f32.mrb[0].mxu0
    %230 = vmatprep.mubr.f32.mxu0 0.0
    %231 = vmatmul.mubr.f32.gmra.mrb[0].mxu0 %v63
    %v232 = vpop.f32.mrb[0].mxu0
    %v233 = vadd.f32 %v54, %v232
    %v234 = vpop.f32.mrb[0].mxu0
    %235 = vmatprep.mubr.f32.mxu0 0.0
    %236 = vmatmul.mubr.f32.gmra.mrb[0].mxu0 %v66
    %v237 = vpop.f32.mrb[0].mxu0
    %v238 = vadd.f32 %v54, %v237
    %v239 = vpop.f32.mrb[0].mxu0
    %240 = vmatprep.mubr.f32.mxu0 0.0
    %241 = vmatmul.mubr.f32.gmra.mrb[0].mxu0 %v69
    %v242 = vpop.f32.mrb[0].mxu0
    %v243 = vadd.f32 %v54, %v242
    %v244 = vpop.f32.mrb[0].mxu0
    %245 = vmatprep.mubr.f32.mxu0 0.0
    %246 = vmatmul.mubr.f32.gmra.mrb[0].mxu0 %v72
    %v247 = vpop.f32.mrb[0].mxu0
    %v248 = vadd.f32 %v54, %v247
    %v249 = vpop.f32.mrb[0].mxu0
    %250 = vmatprep.mubr.f32.mxu0 0.0
    %251 = vmatmul.mubr.f32.gmra.mrb[0].mxu0 %v75
    %v252 = vpop.f32.mrb[0].mxu0
    %v253 = vadd.f32 %v54, %v252
    %v254 = vpop.f32.mrb[0].mxu0
    %255 = vmatprep.mubr.f32.mxu0 0.0
    %256 = vmatmul.mubr.f32.gmra.mrb[0].mxu0 %v78
    %v257 = vpop.f32.mrb[0].mxu0
    %v258 = vadd.f32 %v54, %v257
    %v259 = vpop.f32.mrb[0].mxu0
    %260 = vmatprep.mubr.f32.mxu0 0.0
    %261 = vmatmul.mubr.f32.gmra.mrb[0].mxu0 %v81
    %v262 = vpop.f32.mrb[0].mxu0
    %v263 = vadd.f32 %v54, %v262
    %v264 = vpop.f32.mrb[0].mxu0
    %265 = vmatprep.mubr.f32.mxu0 0.0
    %266 = vmatmul.mubr.f32.gmra.mrb[0].mxu0 %v84
    %v267 = vpop.f32.mrb[0].mxu0
    %v268 = vadd.f32 %v54, %v267
    %v269 = vpop.f32.mrb[0].mxu0
    %270 = vmatprep.mubr.f32.mxu0 0.0
    %271 = vmatmul.mubr.f32.gmra.mrb[0].mxu0 %v87
    %v272 = vpop.f32.mrb[0].mxu0
    %v273 = vadd.f32 %v54, %v272
    %v274 = vpop.f32.mrb[0].mxu0
    %275 = vmatprep.mubr.f32.mxu0 0.0
    %276 = vmatmul.mubr.f32.gmra.mrb[0].mxu0 %v90
    %v277 = vpop.f32.mrb[0].mxu0
    %v278 = vadd.f32 %v54, %v277
    %v279 = vpop.f32.mrb[0].mxu0
    %280 = vmatprep.mubr.f32.mxu0 0.0
    %281 = vmatmul.mubr.f32.gmra.mrb[0].mxu0 %v93
    %v282 = vpop.f32.mrb[0].mxu0
    %v283 = vadd.f32 %v54, %v282
    %v284 = vpop.f32.mrb[0].mxu0
    %285 = vmatprep.mubr.f32.mxu0 0.0
    %286 = vmatmul.mubr.f32.gmra.mrb[0].mxu0 %v96
    %v287 = vpop.f32.mrb[0].mxu0
    %v288 = vadd.f32 %v54, %v287
    %v289 = vpop.f32.mrb[0].mxu0
    %290 = vmatprep.mubr.f32.mxu0 0.0
    %291 = vmatmul.mubr.f32.gmra.mrb[0].mxu0 %v99
    %v292 = vpop.f32.mrb[0].mxu0
    %v293 = vadd.f32 %v54, %v292
    %v294 = vpop.f32.mrb[0].mxu0
    %295 = vmatprep.mubr.f32.mxu0 0.0
    %296 = vmatmul.mubr.f32.gmra.mrb[0].mxu0 %v102
    %v297 = vpop.f32.mrb[0].mxu0
    %v298 = vadd.f32 %v54, %v297
    %v299 = vpop.f32.mrb[0].mxu0
    %300 = vmatprep.mubr.f32.mxu0 0.0
    %301 = vmatmul.mubr.f32.gmra.mrb[0].mxu0 %v105
    %v302 = vpop.f32.mrb[0].mxu0
    %v303 = vadd.f32 %v54, %v302
    %v304 = vpop.f32.mrb[0].mxu0
    %305 = vmatprep.mubr.f32.mxu0 0.0
    %306 = vmatmul.mubr.f32.gmra.mrb[0].mxu0 %v108
    %v307 = vpop.f32.mrb[0].mxu0
    %v308 = vadd.f32 %v54, %v307
    %v309 = vpop.f32.mrb[0].mxu0
    %310 = vmatprep.mubr.f32.mxu0 0.0
    %311 = vmatmul.mubr.f32.gmra.mrb[0].mxu0 %v111
    %v312 = vpop.f32.mrb[0].mxu0
    %v313 = vadd.f32 %v54, %v312
    %v314 = vpop.f32.mrb[0].mxu0
    %315 = vmatprep.mubr.f32.mxu0 0.0
    %316 = vmatmul.mubr.f32.gmra.mrb[0].mxu0 %v114
    %v317 = vpop.f32.mrb[0].mxu0
    %v318 = vadd.f32 %v54, %v317
    %v319 = vpop.f32.mrb[0].mxu0
    %320 = vmatprep.mubr.f32.mxu0 0.0
    %321 = vmatmul.mubr.f32.gmra.mrb[0].mxu0 %v117
    %v322 = vpop.f32.mrb[0].mxu0
    %v323 = vadd.f32 %v54, %v322
    %v324 = vpop.f32.mrb[0].mxu0
    %325 = vmatprep.mubr.f32.mxu0 0.0
    %326 = vmatmul.mubr.f32.gmra.mrb[0].mxu0 %v120
    %v327 = vpop.f32.mrb[0].mxu0
    %v328 = vadd.f32 %v54, %v327
    %v329 = vpop.f32.mrb[0].mxu0
    %330 = vmatprep.mubr.f32.mxu0 0.0
    %331 = vmatmul.mubr.f32.gmra.mrb[0].mxu0 %v123
    %v332 = vpop.f32.mrb[0].mxu0
    %v333 = vadd.f32 %v54, %v332
    %v334 = vpop.f32.mrb[0].mxu0
    %335 = vmatprep.mubr.f32.mxu0 0.0
    %336 = vmatmul.mubr.f32.gmra.mrb[0].mxu0 %v126
    %v337 = vpop.f32.mrb[0].mxu0
    %v338 = vadd.f32 %v54, %v337
    %v339 = vpop.f32.mrb[0].mxu0
    %340 = vmatprep.mubr.f32.mxu0 0.0
    %341 = vmatmul.mubr.f32.gmra.mrb[0].mxu0 %v129
    %v342 = vpop.f32.mrb[0].mxu0
    %v343 = vadd.f32 %v54, %v342
    %v344 = vpop.f32.mrb[0].mxu0
    %345 = vmatprep.mubr.f32.mxu0 0.0
    %346 = vmatmul.mubr.f32.gmra.mrb[0].mxu0 %v132
    %v347 = vpop.f32.mrb[0].mxu0
    %v348 = vadd.f32 %v54, %v347
    %v349 = vpop.f32.mrb[0].mxu0
    %350 = vmatprep.mubr.f32.mxu0 0.0
    %351 = vmatmul.mubr.f32.gmra.mrb[0].mxu0 %v135
    %v352 = vpop.f32.mrb[0].mxu0
    %v353 = vadd.f32 %v54, %v352
    %v354 = vpop.f32.mrb[0].mxu0
    %355 = vmatprep.mubr.f32.mxu0 0.0
    %356 = vmatmul.mubr.f32.gmra.mrb[0].mxu0 %v138
    %v357 = vpop.f32.mrb[0].mxu0
    %v358 = vadd.f32 %v54, %v357
    %v359 = vpop.f32.mrb[0].mxu0
    %360 = vmatprep.mubr.f32.mxu0 0.0
    %361 = vmatmul.mubr.f32.gmra.mrb[0].mxu0 %v141
    %v362 = vpop.f32.mrb[0].mxu0
    %v363 = vadd.f32 %v54, %v362
    %v364 = vpop.f32.mrb[0].mxu0
    %365 = vmatprep.mubr.f32.mxu0 0.0
    %366 = vmatmul.mubr.f32.gmra.mrb[0].mxu0 %v144
    %v367 = vpop.f32.mrb[0].mxu0
    %v368 = vadd.f32 %v54, %v367
    %v369 = vpop.f32.mrb[0].mxu0
    %370 = vmatprep.mubr.f32.mxu0 0.0
    %371 = vmatmul.mubr.f32.gmra.mrb[0].mxu0 %v147
    %v372 = vpop.f32.mrb[0].mxu0
    %v373 = vadd.f32 %v54, %v372
    %v374 = vpop.f32.mrb[0].mxu0
    %375 = vmatprep.mubr.f32.mxu0 0.0
    %376 = vmatmul.mubr.f32.gmra.mrb[0].mxu0 %v150
    %v377 = vpop.f32.mrb[0].mxu0
    %v378 = vadd.f32 %v54, %v377
    %v379 = vpop.f32.mrb[0].mxu0
    %380 = vdwg.mxu0
    %v381 = vmax.f32 %v223, 0.0
    %v382 = vmax.f32 %v228, 0.0
    %v383 = vmax.f32 %v233, 0.0
    %v384 = vmax.f32 %v238, 0.0
    %v385 = vmax.f32 %v243, 0.0
    %v386 = vmax.f32 %v248, 0.0
    %v387 = vmax.f32 %v253, 0.0
    %v388 = vmax.f32 %v258, 0.0
    %v389 = vmax.f32 %v263, 0.0
    %v390 = vmax.f32 %v268, 0.0
    %v391 = vmax.f32 %v273, 0.0
    %v392 = vmax.f32 %v278, 0.0
    %v393 = vmax.f32 %v283, 0.0
    %v394 = vmax.f32 %v288, 0.0
    %v395 = vmax.f32 %v293, 0.0
    %v396 = vmax.f32 %v298, 0.0
    %v397 = vmax.f32 %v303, 0.0
    %v398 = vmax.f32 %v308, 0.0
    %v399 = vmax.f32 %v313, 0.0
    %v400 = vmax.f32 %v318, 0.0
    %v401 = vmax.f32 %v323, 0.0
    %v402 = vmax.f32 %v328, 0.0
    %v403 = vmax.f32 %v333, 0.0
    %v404 = vmax.f32 %v338, 0.0
    %v405 = vmax.f32 %v343, 0.0
    %v406 = vmax.f32 %v348, 0.0
    %v407 = vmax.f32 %v353, 0.0
    %v408 = vmax.f32 %v358, 0.0
    %v409 = vmax.f32 %v363, 0.0
    %v410 = vmax.f32 %v368, 0.0
    %v411 = vmax.f32 %v373, 0.0
    %v412 = vmax.f32 %v378, 0.0
    %v413 = vlaneseq
    %v414 = vshrl.u32 %v413, 7
    %v415 = vsub.s32 0, %v414
    %v416 = vrot.slane %v49, %v415
    %vm417 = vcmask 130048
    %v419 = vsel %vm417, %v381, 0
    %v422 = vsel %vm417, %v382, 0
    %v425 = vsel %vm417, %v383, 0
    %v428 = vsel %vm417, %v384, 0
    %v431 = vsel %vm417, %v385, 0
    %v434 = vsel %vm417, %v386, 0
    %v437 = vsel %vm417, %v387, 0
    %v440 = vsel %vm417, %v388, 0
    %v443 = vsel %vm417, %v389, 0
    %v446 = vsel %vm417, %v390, 0
    %v449 = vsel %vm417, %v391, 0
    %v452 = vsel %vm417, %v392, 0
    %v455 = vsel %vm417, %v393, 0
    %v458 = vsel %vm417, %v394, 0
    %v461 = vsel %vm417, %v395, 0
    %v464 = vsel %vm417, %v396, 0
    %v467 = vsel %vm417, %v397, 0
    %v470 = vsel %vm417, %v398, 0
    %v473 = vsel %vm417, %v399, 0
    %v476 = vsel %vm417, %v400, 0
    %v479 = vsel %vm417, %v401, 0
    %v482 = vsel %vm417, %v402, 0
    %v485 = vsel %vm417, %v403, 0
    %v488 = vsel %vm417, %v404, 0
    %v491 = vsel %vm417, %v405, 0
    %v494 = vsel %vm417, %v406, 0
    %v497 = vsel %vm417, %v407, 0
    %v500 = vsel %vm417, %v408, 0
    %v503 = vsel %vm417, %v409, 0
    %v506 = vsel %vm417, %v410, 0
    %v509 = vsel %vm417, %v411, 0
    %v512 = vsel %vm417, %v412, 0
    %514 = vmatprep.subr.mxu0 0.0
    %515 = vmatpush1.msra.mxu0 %v44
    %516 = vmatprep.subr.mxu0 0.0
    %517 = vmatpush1.msra.mxu0 %v45
    %518 = vmatprep.subr.mxu0 0.0
    %519 = vmatpush1.msra.mxu0 0.0
    %520 = vmatprep.subr.mxu0 0.0
    %521 = vmatpush1.msra.mxu0 0.0
    %522 = vmatprep.subr.mxu0 0.0
    %523 = vmatpush1.msra.mxu0 0.0
    %524 = vmatprep.subr.mxu0 0.0
    %525 = vmatpush1.msra.mxu0 0.0
    %526 = vmatprep.subr.mxu0 0.0
    %527 = vmatpush1.msra.mxu0 0.0
    %528 = vmatprep.subr.mxu0 0.0
    %529 = vmatpush1.msra.mxu0 0.0
    %530 = vmatprep.subr.mxu0 0.0
    %531 = vmatpush1.msra.mxu0 0.0
    %532 = vmatprep.subr.mxu0 0.0
    %533 = vmatpush1.msra.mxu0 0.0
    %534 = vmatprep.subr.mxu0 0.0
    %535 = vmatpush1.msra.mxu0 0.0
    %536 = vmatprep.subr.mxu0 0.0
    %537 = vmatpush1.msra.mxu0 0.0
    %538 = vmatprep.subr.mxu0 0.0
    %539 = vmatpush1.msra.mxu0 0.0
    %540 = vmatprep.subr.mxu0 0.0
    %541 = vmatpush1.msra.mxu0 0.0
    %542 = vmatprep.subr.mxu0 0.0
    %543 = vmatpush1.msra.mxu0 0.0
    %544 = vmatprep.subr.mxu0 0.0
    %545 = vmatpush1.msra.mxu0 0.0
    %546 = vmatprep.subr.mxu0 0.0
    %547 = vmatpush1.msra.mxu0 0.0
    %548 = vmatprep.subr.mxu0 0.0
    %549 = vmatpush1.msra.mxu0 0.0
    %550 = vmatprep.subr.mxu0 0.0
    %551 = vmatpush1.msra.mxu0 0.0
    %552 = vmatprep.subr.mxu0 0.0
    %553 = vmatpush1.msra.mxu0 0.0
    %554 = vmatprep.subr.mxu0 0.0
    %555 = vmatpush1.msra.mxu0 0.0
    %556 = vmatprep.subr.mxu0 0.0
    %557 = vmatpush1.msra.mxu0 0.0
    %558 = vmatprep.subr.mxu0 0.0
    %559 = vmatpush1.msra.mxu0 0.0
    %560 = vmatprep.subr.mxu0 0.0
    %561 = vmatpush1.msra.mxu0 0.0
    %562 = vmatprep.subr.mxu0 0.0
    %563 = vmatpush1.msra.mxu0 0.0
    %564 = vmatprep.subr.mxu0 0.0
    %565 = vmatpush1.msra.mxu0 0.0
    %566 = vmatprep.subr.mxu0 0.0
    %567 = vmatpush1.msra.mxu0 0.0
    %568 = vmatprep.subr.mxu0 0.0
    %569 = vmatpush1.msra.mxu0 0.0
    %570 = vmatprep.subr.mxu0 0.0
    %571 = vmatpush1.msra.mxu0 0.0
    %572 = vmatprep.subr.mxu0 0.0
    %573 = vmatpush1.msra.mxu0 0.0
    %574 = vmatprep.subr.mxu0 0.0
    %575 = vmatpush1.msra.mxu0 0.0
    %576 = vmatprep.subr.mxu0 0.0
    %577 = vmatpush1.msra.mxu0 0.0
    %578 = vmatprep.mubr.f32.mxu0 0.0
    %579 = vmatmul.mubr.f32.gmra.mrb[0].mxu0 %v419
    %v580 = vpop.f32.mrb[0].mxu0
    %v581 = vadd.f32 %v416, %v580
    %v582 = vpop.f32.mrb[0].mxu0
    %583 = vmatprep.mubr.f32.mxu0 0.0
    %584 = vmatmul.mubr.f32.gmra.mrb[0].mxu0 %v422
    %v585 = vpop.f32.mrb[0].mxu0
    %v586 = vadd.f32 %v416, %v585
    %v587 = vpop.f32.mrb[0].mxu0
    %588 = vmatprep.mubr.f32.mxu0 0.0
    %589 = vmatmul.mubr.f32.gmra.mrb[0].mxu0 %v425
    %v590 = vpop.f32.mrb[0].mxu0
    %v591 = vadd.f32 %v416, %v590
    %v592 = vpop.f32.mrb[0].mxu0
    %593 = vmatprep.mubr.f32.mxu0 0.0
    %594 = vmatmul.mubr.f32.gmra.mrb[0].mxu0 %v428
    %v595 = vpop.f32.mrb[0].mxu0
    %v596 = vadd.f32 %v416, %v595
    %v597 = vpop.f32.mrb[0].mxu0
    %598 = vmatprep.mubr.f32.mxu0 0.0
    %599 = vmatmul.mubr.f32.gmra.mrb[0].mxu0 %v431
    %v600 = vpop.f32.mrb[0].mxu0
    %v601 = vadd.f32 %v416, %v600
    %v602 = vpop.f32.mrb[0].mxu0
    %603 = vmatprep.mubr.f32.mxu0 0.0
    %604 = vmatmul.mubr.f32.gmra.mrb[0].mxu0 %v434
    %v605 = vpop.f32.mrb[0].mxu0
    %v606 = vadd.f32 %v416, %v605
    %v607 = vpop.f32.mrb[0].mxu0
    %608 = vmatprep.mubr.f32.mxu0 0.0
    %609 = vmatmul.mubr.f32.gmra.mrb[0].mxu0 %v437
    %v610 = vpop.f32.mrb[0].mxu0
    %v611 = vadd.f32 %v416, %v610
    %v612 = vpop.f32.mrb[0].mxu0
    %613 = vmatprep.mubr.f32.mxu0 0.0
    %614 = vmatmul.mubr.f32.gmra.mrb[0].mxu0 %v440
    %v615 = vpop.f32.mrb[0].mxu0
    %v616 = vadd.f32 %v416, %v615
    %v617 = vpop.f32.mrb[0].mxu0
    %618 = vmatprep.mubr.f32.mxu0 0.0
    %619 = vmatmul.mubr.f32.gmra.mrb[0].mxu0 %v443
    %v620 = vpop.f32.mrb[0].mxu0
    %v621 = vadd.f32 %v416, %v620
    %v622 = vpop.f32.mrb[0].mxu0
    %623 = vmatprep.mubr.f32.mxu0 0.0
    %624 = vmatmul.mubr.f32.gmra.mrb[0].mxu0 %v446
    %v625 = vpop.f32.mrb[0].mxu0
    %v626 = vadd.f32 %v416, %v625
    %v627 = vpop.f32.mrb[0].mxu0
    %628 = vmatprep.mubr.f32.mxu0 0.0
    %629 = vmatmul.mubr.f32.gmra.mrb[0].mxu0 %v449
    %v630 = vpop.f32.mrb[0].mxu0
    %v631 = vadd.f32 %v416, %v630
    %v632 = vpop.f32.mrb[0].mxu0
    %633 = vmatprep.mubr.f32.mxu0 0.0
    %634 = vmatmul.mubr.f32.gmra.mrb[0].mxu0 %v452
    %v635 = vpop.f32.mrb[0].mxu0
    %v636 = vadd.f32 %v416, %v635
    %v637 = vpop.f32.mrb[0].mxu0
    %638 = vmatprep.mubr.f32.mxu0 0.0
    %639 = vmatmul.mubr.f32.gmra.mrb[0].mxu0 %v455
    %v640 = vpop.f32.mrb[0].mxu0
    %v641 = vadd.f32 %v416, %v640
    %v642 = vpop.f32.mrb[0].mxu0
    %643 = vmatprep.mubr.f32.mxu0 0.0
    %644 = vmatmul.mubr.f32.gmra.mrb[0].mxu0 %v458
    %v645 = vpop.f32.mrb[0].mxu0
    %v646 = vadd.f32 %v416, %v645
    %v647 = vpop.f32.mrb[0].mxu0
    %648 = vmatprep.mubr.f32.mxu0 0.0
    %649 = vmatmul.mubr.f32.gmra.mrb[0].mxu0 %v461
    %v650 = vpop.f32.mrb[0].mxu0
    %v651 = vadd.f32 %v416, %v650
    %v652 = vpop.f32.mrb[0].mxu0
    %653 = vmatprep.mubr.f32.mxu0 0.0
    %654 = vmatmul.mubr.f32.gmra.mrb[0].mxu0 %v464
    %v655 = vpop.f32.mrb[0].mxu0
    %v656 = vadd.f32 %v416, %v655
    %v657 = vpop.f32.mrb[0].mxu0
    %658 = vmatprep.mubr.f32.mxu0 0.0
    %659 = vmatmul.mubr.f32.gmra.mrb[0].mxu0 %v467
    %v660 = vpop.f32.mrb[0].mxu0
    %v661 = vadd.f32 %v416, %v660
    %v662 = vpop.f32.mrb[0].mxu0
    %663 = vmatprep.mubr.f32.mxu0 0.0
    %664 = vmatmul.mubr.f32.gmra.mrb[0].mxu0 %v470
    %v665 = vpop.f32.mrb[0].mxu0
    %v666 = vadd.f32 %v416, %v665
    %v667 = vpop.f32.mrb[0].mxu0
    %668 = vmatprep.mubr.f32.mxu0 0.0
    %669 = vmatmul.mubr.f32.gmra.mrb[0].mxu0 %v473
    %v670 = vpop.f32.mrb[0].mxu0
    %v671 = vadd.f32 %v416, %v670
    %v672 = vpop.f32.mrb[0].mxu0
    %673 = vmatprep.mubr.f32.mxu0 0.0
    %674 = vmatmul.mubr.f32.gmra.mrb[0].mxu0 %v476
    %v675 = vpop.f32.mrb[0].mxu0
    %v676 = vadd.f32 %v416, %v675
    %v677 = vpop.f32.mrb[0].mxu0
    %678 = vmatprep.mubr.f32.mxu0 0.0
    %679 = vmatmul.mubr.f32.gmra.mrb[0].mxu0 %v479
    %v680 = vpop.f32.mrb[0].mxu0
    %v681 = vadd.f32 %v416, %v680
    %v682 = vpop.f32.mrb[0].mxu0
    %683 = vmatprep.mubr.f32.mxu0 0.0
    %684 = vmatmul.mubr.f32.gmra.mrb[0].mxu0 %v482
    %v685 = vpop.f32.mrb[0].mxu0
    %v686 = vadd.f32 %v416, %v685
    %v687 = vpop.f32.mrb[0].mxu0
    %688 = vmatprep.mubr.f32.mxu0 0.0
    %689 = vmatmul.mubr.f32.gmra.mrb[0].mxu0 %v485
    %v690 = vpop.f32.mrb[0].mxu0
    %v691 = vadd.f32 %v416, %v690
    %v692 = vpop.f32.mrb[0].mxu0
    %693 = vmatprep.mubr.f32.mxu0 0.0
    %694 = vmatmul.mubr.f32.gmra.mrb[0].mxu0 %v488
    %v695 = vpop.f32.mrb[0].mxu0
    %v696 = vadd.f32 %v416, %v695
    %v697 = vpop.f32.mrb[0].mxu0
    %698 = vmatprep.mubr.f32.mxu0 0.0
    %699 = vmatmul.mubr.f32.gmra.mrb[0].mxu0 %v491
    %v700 = vpop.f32.mrb[0].mxu0
    %v701 = vadd.f32 %v416, %v700
    %v702 = vpop.f32.mrb[0].mxu0
    %703 = vmatprep.mubr.f32.mxu0 0.0
    %704 = vmatmul.mubr.f32.gmra.mrb[0].mxu0 %v494
    %v705 = vpop.f32.mrb[0].mxu0
    %v706 = vadd.f32 %v416, %v705
    %v707 = vpop.f32.mrb[0].mxu0
    %708 = vmatprep.mubr.f32.mxu0 0.0
    %709 = vmatmul.mubr.f32.gmra.mrb[0].mxu0 %v497
    %v710 = vpop.f32.mrb[0].mxu0
    %v711 = vadd.f32 %v416, %v710
    %v712 = vpop.f32.mrb[0].mxu0
    %713 = vmatprep.mubr.f32.mxu0 0.0
    %714 = vmatmul.mubr.f32.gmra.mrb[0].mxu0 %v500
    %v715 = vpop.f32.mrb[0].mxu0
    %v716 = vadd.f32 %v416, %v715
    %v717 = vpop.f32.mrb[0].mxu0
    %718 = vmatprep.mubr.f32.mxu0 0.0
    %719 = vmatmul.mubr.f32.gmra.mrb[0].mxu0 %v503
    %v720 = vpop.f32.mrb[0].mxu0
    %v721 = vadd.f32 %v416, %v720
    %v722 = vpop.f32.mrb[0].mxu0
    %723 = vmatprep.mubr.f32.mxu0 0.0
    %724 = vmatmul.mubr.f32.gmra.mrb[0].mxu0 %v506
    %v725 = vpop.f32.mrb[0].mxu0
    %v726 = vadd.f32 %v416, %v725
    %v727 = vpop.f32.mrb[0].mxu0
    %728 = vmatprep.mubr.f32.mxu0 0.0
    %729 = vmatmul.mubr.f32.gmra.mrb[0].mxu0 %v509
    %v730 = vpop.f32.mrb[0].mxu0
    %v731 = vadd.f32 %v416, %v730
    %v732 = vpop.f32.mrb[0].mxu0
    %733 = vmatprep.mubr.f32.mxu0 0.0
    %734 = vmatmul.mubr.f32.gmra.mrb[0].mxu0 %v512
    %v735 = vpop.f32.mrb[0].mxu0
    %v736 = vadd.f32 %v416, %v735
    %v737 = vpop.f32.mrb[0].mxu0
    %738 = vdwg.mxu0
    %v739 = vmax.f32 %v581, 0.0
    %v740 = vmax.f32 %v586, 0.0
    %v741 = vmax.f32 %v591, 0.0
    %v742 = vmax.f32 %v596, 0.0
    %v743 = vmax.f32 %v601, 0.0
    %v744 = vmax.f32 %v606, 0.0
    %v745 = vmax.f32 %v611, 0.0
    %v746 = vmax.f32 %v616, 0.0
    %v747 = vmax.f32 %v621, 0.0
    %v748 = vmax.f32 %v626, 0.0
    %v749 = vmax.f32 %v631, 0.0
    %v750 = vmax.f32 %v636, 0.0
    %v751 = vmax.f32 %v641, 0.0
    %v752 = vmax.f32 %v646, 0.0
    %v753 = vmax.f32 %v651, 0.0
    %v754 = vmax.f32 %v656, 0.0
    %v755 = vmax.f32 %v661, 0.0
    %v756 = vmax.f32 %v666, 0.0
    %v757 = vmax.f32 %v671, 0.0
    %v758 = vmax.f32 %v676, 0.0
    %v759 = vmax.f32 %v681, 0.0
    %v760 = vmax.f32 %v686, 0.0
    %v761 = vmax.f32 %v691, 0.0
    %v762 = vmax.f32 %v696, 0.0
    %v763 = vmax.f32 %v701, 0.0
    %v764 = vmax.f32 %v706, 0.0
    %v765 = vmax.f32 %v711, 0.0
    %v766 = vmax.f32 %v716, 0.0
    %v767 = vmax.f32 %v721, 0.0
    %v768 = vmax.f32 %v726, 0.0
    %v769 = vmax.f32 %v731, 0.0
    %v770 = vmax.f32 %v736, 0.0
    %v771 = vlaneseq
    %v772 = vshrl.u32 %v771, 7
    %v773 = vsub.s32 0, %v772
    %v774 = vrot.slane %v50, %v773
    %v776 = vsel %vm417, %v739, 0
    %v779 = vsel %vm417, %v740, 0
    %v782 = vsel %vm417, %v741, 0
    %v785 = vsel %vm417, %v742, 0
    %v788 = vsel %vm417, %v743, 0
    %v791 = vsel %vm417, %v744, 0
    %v794 = vsel %vm417, %v745, 0
    %v797 = vsel %vm417, %v746, 0
    %v800 = vsel %vm417, %v747, 0
    %v803 = vsel %vm417, %v748, 0
    %v806 = vsel %vm417, %v749, 0
    %v809 = vsel %vm417, %v750, 0
    %v812 = vsel %vm417, %v751, 0
    %v815 = vsel %vm417, %v752, 0
    %v818 = vsel %vm417, %v753, 0
    %v821 = vsel %vm417, %v754, 0
    %v824 = vsel %vm417, %v755, 0
    %v827 = vsel %vm417, %v756, 0
    %v830 = vsel %vm417, %v757, 0
    %v833 = vsel %vm417, %v758, 0
    %v836 = vsel %vm417, %v759, 0
    %v839 = vsel %vm417, %v760, 0
    %v842 = vsel %vm417, %v761, 0
    %v845 = vsel %vm417, %v762, 0
    %v848 = vsel %vm417, %v763, 0
    %v851 = vsel %vm417, %v764, 0
    %v854 = vsel %vm417, %v765, 0
    %v857 = vsel %vm417, %v766, 0
    %v860 = vsel %vm417, %v767, 0
    %v863 = vsel %vm417, %v768, 0
    %v866 = vsel %vm417, %v769, 0
    %v869 = vsel %vm417, %v770, 0
    %871 = vmatprep.subr.mxu0 0.0
    %872 = vmatpush1.msra.mxu0 %v46
    %873 = vmatprep.subr.mxu0 0.0
    %874 = vmatpush1.msra.mxu0 %v47
    %875 = vmatprep.subr.mxu0 0.0
    %876 = vmatpush1.msra.mxu0 0.0
    %877 = vmatprep.subr.mxu0 0.0
    %878 = vmatpush1.msra.mxu0 0.0
    %879 = vmatprep.subr.mxu0 0.0
    %880 = vmatpush1.msra.mxu0 0.0
    %881 = vmatprep.subr.mxu0 0.0
    %882 = vmatpush1.msra.mxu0 0.0
    %883 = vmatprep.subr.mxu0 0.0
    %884 = vmatpush1.msra.mxu0 0.0
    %885 = vmatprep.subr.mxu0 0.0
    %886 = vmatpush1.msra.mxu0 0.0
    %887 = vmatprep.subr.mxu0 0.0
    %888 = vmatpush1.msra.mxu0 0.0
    %889 = vmatprep.subr.mxu0 0.0
    %890 = vmatpush1.msra.mxu0 0.0
    %891 = vmatprep.subr.mxu0 0.0
    %892 = vmatpush1.msra.mxu0 0.0
    %893 = vmatprep.subr.mxu0 0.0
    %894 = vmatpush1.msra.mxu0 0.0
    %895 = vmatprep.subr.mxu0 0.0
    %896 = vmatpush1.msra.mxu0 0.0
    %897 = vmatprep.subr.mxu0 0.0
    %898 = vmatpush1.msra.mxu0 0.0
    %899 = vmatprep.subr.mxu0 0.0
    %900 = vmatpush1.msra.mxu0 0.0
    %901 = vmatprep.subr.mxu0 0.0
    %902 = vmatpush1.msra.mxu0 0.0
    %903 = vmatprep.subr.mxu0 0.0
    %904 = vmatpush1.msra.mxu0 0.0
    %905 = vmatprep.subr.mxu0 0.0
    %906 = vmatpush1.msra.mxu0 0.0
    %907 = vmatprep.subr.mxu0 0.0
    %908 = vmatpush1.msra.mxu0 0.0
    %909 = vmatprep.subr.mxu0 0.0
    %910 = vmatpush1.msra.mxu0 0.0
    %911 = vmatprep.subr.mxu0 0.0
    %912 = vmatpush1.msra.mxu0 0.0
    %913 = vmatprep.subr.mxu0 0.0
    %914 = vmatpush1.msra.mxu0 0.0
    %915 = vmatprep.subr.mxu0 0.0
    %916 = vmatpush1.msra.mxu0 0.0
    %917 = vmatprep.subr.mxu0 0.0
    %918 = vmatpush1.msra.mxu0 0.0
    %919 = vmatprep.subr.mxu0 0.0
    %920 = vmatpush1.msra.mxu0 0.0
    %921 = vmatprep.subr.mxu0 0.0
    %922 = vmatpush1.msra.mxu0 0.0
    %923 = vmatprep.subr.mxu0 0.0
    %924 = vmatpush1.msra.mxu0 0.0
    %925 = vmatprep.subr.mxu0 0.0
    %926 = vmatpush1.msra.mxu0 0.0
    %927 = vmatprep.subr.mxu0 0.0
    %928 = vmatpush1.msra.mxu0 0.0
    %929 = vmatprep.subr.mxu0 0.0
    %930 = vmatpush1.msra.mxu0 0.0
    %931 = vmatprep.subr.mxu0 0.0
    %932 = vmatpush1.msra.mxu0 0.0
    %933 = vmatprep.subr.mxu0 0.0
    %934 = vmatpush1.msra.mxu0 0.0
    %935 = vmatprep.mubr.f32.mxu0 0.0
    %936 = vmatmul.mubr.f32.gmra.mrb[0].mxu0 %v776
    %v937 = vpop.f32.mrb[0].mxu0
    %v938 = vadd.f32 %v774, %v937
    %v939 = vpop.f32.mrb[0].mxu0
    %940 = vmatprep.mubr.f32.mxu0 0.0
    %941 = vmatmul.mubr.f32.gmra.mrb[0].mxu0 %v779
    %v942 = vpop.f32.mrb[0].mxu0
    %v943 = vadd.f32 %v774, %v942
    %v944 = vpop.f32.mrb[0].mxu0
    %945 = vmatprep.mubr.f32.mxu0 0.0
    %946 = vmatmul.mubr.f32.gmra.mrb[0].mxu0 %v782
    %v947 = vpop.f32.mrb[0].mxu0
    %v948 = vadd.f32 %v774, %v947
    %v949 = vpop.f32.mrb[0].mxu0
    %950 = vmatprep.mubr.f32.mxu0 0.0
    %951 = vmatmul.mubr.f32.gmra.mrb[0].mxu0 %v785
    %v952 = vpop.f32.mrb[0].mxu0
    %v953 = vadd.f32 %v774, %v952
    %v954 = vpop.f32.mrb[0].mxu0
    %955 = vmatprep.mubr.f32.mxu0 0.0
    %956 = vmatmul.mubr.f32.gmra.mrb[0].mxu0 %v788
    %v957 = vpop.f32.mrb[0].mxu0
    %v958 = vadd.f32 %v774, %v957
    %v959 = vpop.f32.mrb[0].mxu0
    %960 = vmatprep.mubr.f32.mxu0 0.0
    %961 = vmatmul.mubr.f32.gmra.mrb[0].mxu0 %v791
    %v962 = vpop.f32.mrb[0].mxu0
    %v963 = vadd.f32 %v774, %v962
    %v964 = vpop.f32.mrb[0].mxu0
    %965 = vmatprep.mubr.f32.mxu0 0.0
    %966 = vmatmul.mubr.f32.gmra.mrb[0].mxu0 %v794
    %v967 = vpop.f32.mrb[0].mxu0
    %v968 = vadd.f32 %v774, %v967
    %v969 = vpop.f32.mrb[0].mxu0
    %970 = vmatprep.mubr.f32.mxu0 0.0
    %971 = vmatmul.mubr.f32.gmra.mrb[0].mxu0 %v797
    %v972 = vpop.f32.mrb[0].mxu0
    %v973 = vadd.f32 %v774, %v972
    %v974 = vpop.f32.mrb[0].mxu0
    %975 = vmatprep.mubr.f32.mxu0 0.0
    %976 = vmatmul.mubr.f32.gmra.mrb[0].mxu0 %v800
    %v977 = vpop.f32.mrb[0].mxu0
    %v978 = vadd.f32 %v774, %v977
    %v979 = vpop.f32.mrb[0].mxu0
    %980 = vmatprep.mubr.f32.mxu0 0.0
    %981 = vmatmul.mubr.f32.gmra.mrb[0].mxu0 %v803
    %v982 = vpop.f32.mrb[0].mxu0
    %v983 = vadd.f32 %v774, %v982
    %v984 = vpop.f32.mrb[0].mxu0
    %985 = vmatprep.mubr.f32.mxu0 0.0
    %986 = vmatmul.mubr.f32.gmra.mrb[0].mxu0 %v806
    %v987 = vpop.f32.mrb[0].mxu0
    %v988 = vadd.f32 %v774, %v987
    %v989 = vpop.f32.mrb[0].mxu0
    %990 = vmatprep.mubr.f32.mxu0 0.0
    %991 = vmatmul.mubr.f32.gmra.mrb[0].mxu0 %v809
    %v992 = vpop.f32.mrb[0].mxu0
    %v993 = vadd.f32 %v774, %v992
    %v994 = vpop.f32.mrb[0].mxu0
    %995 = vmatprep.mubr.f32.mxu0 0.0
    %996 = vmatmul.mubr.f32.gmra.mrb[0].mxu0 %v812
    %v997 = vpop.f32.mrb[0].mxu0
    %v998 = vadd.f32 %v774, %v997
    %v999 = vpop.f32.mrb[0].mxu0
    %1000 = vmatprep.mubr.f32.mxu0 0.0
    %1001 = vmatmul.mubr.f32.gmra.mrb[0].mxu0 %v815
    %v1002 = vpop.f32.mrb[0].mxu0
    %v1003 = vadd.f32 %v774, %v1002
    %v1004 = vpop.f32.mrb[0].mxu0
    %1005 = vmatprep.mubr.f32.mxu0 0.0
    %1006 = vmatmul.mubr.f32.gmra.mrb[0].mxu0 %v818
    %v1007 = vpop.f32.mrb[0].mxu0
    %v1008 = vadd.f32 %v774, %v1007
    %v1009 = vpop.f32.mrb[0].mxu0
    %1010 = vmatprep.mubr.f32.mxu0 0.0
    %1011 = vmatmul.mubr.f32.gmra.mrb[0].mxu0 %v821
    %v1012 = vpop.f32.mrb[0].mxu0
    %v1013 = vadd.f32 %v774, %v1012
    %v1014 = vpop.f32.mrb[0].mxu0
    %1015 = vmatprep.mubr.f32.mxu0 0.0
    %1016 = vmatmul.mubr.f32.gmra.mrb[0].mxu0 %v824
    %v1017 = vpop.f32.mrb[0].mxu0
    %v1018 = vadd.f32 %v774, %v1017
    %v1019 = vpop.f32.mrb[0].mxu0
    %1020 = vmatprep.mubr.f32.mxu0 0.0
    %1021 = vmatmul.mubr.f32.gmra.mrb[0].mxu0 %v827
    %v1022 = vpop.f32.mrb[0].mxu0
    %v1023 = vadd.f32 %v774, %v1022
    %v1024 = vpop.f32.mrb[0].mxu0
    %1025 = vmatprep.mubr.f32.mxu0 0.0
    %1026 = vmatmul.mubr.f32.gmra.mrb[0].mxu0 %v830
    %v1027 = vpop.f32.mrb[0].mxu0
    %v1028 = vadd.f32 %v774, %v1027
    %v1029 = vpop.f32.mrb[0].mxu0
    %1030 = vmatprep.mubr.f32.mxu0 0.0
    %1031 = vmatmul.mubr.f32.gmra.mrb[0].mxu0 %v833
    %v1032 = vpop.f32.mrb[0].mxu0
    %v1033 = vadd.f32 %v774, %v1032
    %v1034 = vpop.f32.mrb[0].mxu0
    %1035 = vmatprep.mubr.f32.mxu0 0.0
    %1036 = vmatmul.mubr.f32.gmra.mrb[0].mxu0 %v836
    %v1037 = vpop.f32.mrb[0].mxu0
    %v1038 = vadd.f32 %v774, %v1037
    %v1039 = vpop.f32.mrb[0].mxu0
    %1040 = vmatprep.mubr.f32.mxu0 0.0
    %1041 = vmatmul.mubr.f32.gmra.mrb[0].mxu0 %v839
    %v1042 = vpop.f32.mrb[0].mxu0
    %v1043 = vadd.f32 %v774, %v1042
    %v1044 = vpop.f32.mrb[0].mxu0
    %1045 = vmatprep.mubr.f32.mxu0 0.0
    %1046 = vmatmul.mubr.f32.gmra.mrb[0].mxu0 %v842
    %v1047 = vpop.f32.mrb[0].mxu0
    %v1048 = vadd.f32 %v774, %v1047
    %v1049 = vpop.f32.mrb[0].mxu0
    %1050 = vmatprep.mubr.f32.mxu0 0.0
    %1051 = vmatmul.mubr.f32.gmra.mrb[0].mxu0 %v845
    %v1052 = vpop.f32.mrb[0].mxu0
    %v1053 = vadd.f32 %v774, %v1052
    %v1054 = vpop.f32.mrb[0].mxu0
    %1055 = vmatprep.mubr.f32.mxu0 0.0
    %1056 = vmatmul.mubr.f32.gmra.mrb[0].mxu0 %v848
    %v1057 = vpop.f32.mrb[0].mxu0
    %v1058 = vadd.f32 %v774, %v1057
    %v1059 = vpop.f32.mrb[0].mxu0
    %1060 = vmatprep.mubr.f32.mxu0 0.0
    %1061 = vmatmul.mubr.f32.gmra.mrb[0].mxu0 %v851
    %v1062 = vpop.f32.mrb[0].mxu0
    %v1063 = vadd.f32 %v774, %v1062
    %v1064 = vpop.f32.mrb[0].mxu0
    %1065 = vmatprep.mubr.f32.mxu0 0.0
    %1066 = vmatmul.mubr.f32.gmra.mrb[0].mxu0 %v854
    %v1067 = vpop.f32.mrb[0].mxu0
    %v1068 = vadd.f32 %v774, %v1067
    %v1069 = vpop.f32.mrb[0].mxu0
    %1070 = vmatprep.mubr.f32.mxu0 0.0
    %1071 = vmatmul.mubr.f32.gmra.mrb[0].mxu0 %v857
    %v1072 = vpop.f32.mrb[0].mxu0
    %v1073 = vadd.f32 %v774, %v1072
    %v1074 = vpop.f32.mrb[0].mxu0
    %1075 = vmatprep.mubr.f32.mxu0 0.0
    %1076 = vmatmul.mubr.f32.gmra.mrb[0].mxu0 %v860
    %v1077 = vpop.f32.mrb[0].mxu0
    %v1078 = vadd.f32 %v774, %v1077
    %v1079 = vpop.f32.mrb[0].mxu0
    %1080 = vmatprep.mubr.f32.mxu0 0.0
    %1081 = vmatmul.mubr.f32.gmra.mrb[0].mxu0 %v863
    %v1082 = vpop.f32.mrb[0].mxu0
    %v1083 = vadd.f32 %v774, %v1082
    %v1084 = vpop.f32.mrb[0].mxu0
    %1085 = vmatprep.mubr.f32.mxu0 0.0
    %1086 = vmatmul.mubr.f32.gmra.mrb[0].mxu0 %v866
    %v1087 = vpop.f32.mrb[0].mxu0
    %v1088 = vadd.f32 %v774, %v1087
    %v1089 = vpop.f32.mrb[0].mxu0
    %1090 = vmatprep.mubr.f32.mxu0 0.0
    %1091 = vmatmul.mubr.f32.gmra.mrb[0].mxu0 %v869
    %v1092 = vpop.f32.mrb[0].mxu0
    %v1093 = vadd.f32 %v774, %v1092
    %v1094 = vpop.f32.mrb[0].mxu0
    %1095 = vdwg.mxu0
    %vm1096 = vcmask 15360
    %1097 = vst.msk [vmem:[#allocation2] sm:$0xff] %vm1096, %v938
    %1098 = vst.msk [vmem:[#allocation2 + $0x8] sm:$0xff] %vm1096, %v943
    %1099 = vst.msk [vmem:[#allocation2 + $0x10] sm:$0xff] %vm1096, %v948
    %1100 = vst.msk [vmem:[#allocation2 + $0x18] sm:$0xff] %vm1096, %v953
    %1101 = vst.msk [vmem:[#allocation2 + $0x20] sm:$0xff] %vm1096, %v958
    %1102 = vst.msk [vmem:[#allocation2 + $0x28] sm:$0xff] %vm1096, %v963
    %1103 = vst.msk [vmem:[#allocation2 + $0x30] sm:$0xff] %vm1096, %v968
    %1104 = vst.msk [vmem:[#allocation2 + $0x38] sm:$0xff] %vm1096, %v973
    %1105 = vst.msk [vmem:[#allocation2 + $0x40] sm:$0xff] %vm1096, %v978
    %1106 = vst.msk [vmem:[#allocation2 + $0x48] sm:$0xff] %vm1096, %v983
    %1107 = vst.msk [vmem:[#allocation2 + $0x50] sm:$0xff] %vm1096, %v988
    %1108 = vst.msk [vmem:[#allocation2 + $0x58] sm:$0xff] %vm1096, %v993
    %1109 = vst.msk [vmem:[#allocation2 + $0x60] sm:$0xff] %vm1096, %v998
    %1110 = vst.msk [vmem:[#allocation2 + $0x68] sm:$0xff] %vm1096, %v1003
    %1111 = vst.msk [vmem:[#allocation2 + $0x70] sm:$0xff] %vm1096, %v1008
    %1112 = vst.msk [vmem:[#allocation2 + $0x78] sm:$0xff] %vm1096, %v1013
    %1113 = vst.msk [vmem:[#allocation2 + $0x80] sm:$0xff] %vm1096, %v1018
    %1114 = vst.msk [vmem:[#allocation2 + $0x88] sm:$0xff] %vm1096, %v1023
    %1115 = vst.msk [vmem:[#allocation2 + $0x90] sm:$0xff] %vm1096, %v1028
    %1116 = vst.msk [vmem:[#allocation2 + $0x98] sm:$0xff] %vm1096, %v1033
    %1117 = vst.msk [vmem:[#allocation2 + $0xa0] sm:$0xff] %vm1096, %v1038
    %1118 = vst.msk [vmem:[#allocation2 + $0xa8] sm:$0xff] %vm1096, %v1043
    %1119 = vst.msk [vmem:[#allocation2 + $0xb0] sm:$0xff] %vm1096, %v1048
    %1120 = vst.msk [vmem:[#allocation2 + $0xb8] sm:$0xff] %vm1096, %v1053
    %1121 = vst.msk [vmem:[#allocation2 + $0xc0] sm:$0xff] %vm1096, %v1058
    %1122 = vst.msk [vmem:[#allocation2 + $0xc8] sm:$0xff] %vm1096, %v1063
    %1123 = vst.msk [vmem:[#allocation2 + $0xd0] sm:$0xff] %vm1096, %v1068
    %1124 = vst.msk [vmem:[#allocation2 + $0xd8] sm:$0xff] %vm1096, %v1073
    %1125 = vst.msk [vmem:[#allocation2 + $0xe0] sm:$0xff] %vm1096, %v1078
    %1126 = vst.msk [vmem:[#allocation2 + $0xe8] sm:$0xff] %vm1096, %v1083
    %1127 = vst.msk [vmem:[#allocation2 + $0xf0] sm:$0xff] %vm1096, %v1088
    %1128 = vst.msk [vmem:[#allocation2 + $0xf8] sm:$0xff] %vm1096, %v1093
    // Predicated region
    $region10: #{my_net_forward.1} parent=1 // pred_check
      _
    $region11: #{my_net_forward.1} parent=1 // pred_check_branch
      %1130 = sbr.rel (0) target = $region13
    $region12: #{my_net_forward.1} parent=1 // pred_region
      // Predicated region
      $region14: #{my_net_forward.1} parent=12 // pred_check
        _
      $region15: #{my_net_forward.1} parent=12 // pred_check_branch
        %1132 = sbr.rel (0) target = $region17
      $region16: #{my_net_forward.1} parent=12 // pred_region
        // Predicated region
        $region18: #{my_net_forward.1} parent=16 // pred_check
          _
        $region19: #{my_net_forward.1} parent=16 // pred_check_branch
          %1134 = sbr.rel (0) target = $region21
        $region20: #{my_net_forward.1} parent=16 // pred_region
          // Predicated region
          $region33: #{my_net_forward.1} parent=20 // pred_check
            _
          $region34: #{my_net_forward.1} parent=20 // pred_check_branch
            %1197 = sbr.rel (0) target = $region36
          $region35: #{my_net_forward.1} parent=20 // pred_region
            loop: start=0, step=1, limit=1
            $region37: #{my_net_forward.1} parent=35 // loop_pre_header
              _
            $region38: #{my_net_forward.1} parent=35 // loop_header
              %s1199 = sphi 0, %s1203
              %p1200 = scmp.ge.s32.totalorder %s1199, 1
              %s1204 = sphi [#allocation2], [#allocation2]
              %s1205 = sphi %s2, %s2
            $region39: #{my_net_forward.1} parent=35 // loop_header_branch
              %1202 = sbr.rel (%p1200) target = $region43
            $region40: #{my_net_forward.1} parent=35 // loop_body
              %v1206 = vld [vmem:[%s1204] sm:$0xff]
              %1207 = vst [vmem:[%s1205] sm:$0xff] %v1206
              %v1208 = vld [vmem:[%s1204 + $0x8] sm:$0xff]
              %1209 = vst [vmem:[%s1205 + $0x8] sm:$0xff] %v1208
              %v1210 = vld [vmem:[%s1204 + $0x10] sm:$0xff]
              %1211 = vst [vmem:[%s1205 + $0x10] sm:$0xff] %v1210
              %v1212 = vld [vmem:[%s1204 + $0x18] sm:$0xff]
              %1213 = vst [vmem:[%s1205 + $0x18] sm:$0xff] %v1212
              %v1214 = vld [vmem:[%s1204 + $0x20] sm:$0xff]
              %1215 = vst [vmem:[%s1205 + $0x20] sm:$0xff] %v1214
              %v1216 = vld [vmem:[%s1204 + $0x28] sm:$0xff]
              %1217 = vst [vmem:[%s1205 + $0x28] sm:$0xff] %v1216
              %v1218 = vld [vmem:[%s1204 + $0x30] sm:$0xff]
              %1219 = vst [vmem:[%s1205 + $0x30] sm:$0xff] %v1218
              %v1220 = vld [vmem:[%s1204 + $0x38] sm:$0xff]
              %1221 = vst [vmem:[%s1205 + $0x38] sm:$0xff] %v1220
              %v1222 = vld [vmem:[%s1204 + $0x40] sm:$0xff]
              %1223 = vst [vmem:[%s1205 + $0x40] sm:$0xff] %v1222
              %v1224 = vld [vmem:[%s1204 + $0x48] sm:$0xff]
              %1225 = vst [vmem:[%s1205 + $0x48] sm:$0xff] %v1224
              %v1226 = vld [vmem:[%s1204 + $0x50] sm:$0xff]
              %1227 = vst [vmem:[%s1205 + $0x50] sm:$0xff] %v1226
              %v1228 = vld [vmem:[%s1204 + $0x58] sm:$0xff]
              %1229 = vst [vmem:[%s1205 + $0x58] sm:$0xff] %v1228
              %v1230 = vld [vmem:[%s1204 + $0x60] sm:$0xff]
              %1231 = vst [vmem:[%s1205 + $0x60] sm:$0xff] %v1230
              %v1232 = vld [vmem:[%s1204 + $0x68] sm:$0xff]
              %1233 = vst [vmem:[%s1205 + $0x68] sm:$0xff] %v1232
              %v1234 = vld [vmem:[%s1204 + $0x70] sm:$0xff]
              %1235 = vst [vmem:[%s1205 + $0x70] sm:$0xff] %v1234
              %v1236 = vld [vmem:[%s1204 + $0x78] sm:$0xff]
              %1237 = vst [vmem:[%s1205 + $0x78] sm:$0xff] %v1236
              %v1238 = vld [vmem:[%s1204 + $0x80] sm:$0xff]
              %1239 = vst [vmem:[%s1205 + $0x80] sm:$0xff] %v1238
              %v1240 = vld [vmem:[%s1204 + $0x88] sm:$0xff]
              %1241 = vst [vmem:[%s1205 + $0x88] sm:$0xff] %v1240
              %v1242 = vld [vmem:[%s1204 + $0x90] sm:$0xff]
              %1243 = vst [vmem:[%s1205 + $0x90] sm:$0xff] %v1242
              %v1244 = vld [vmem:[%s1204 + $0x98] sm:$0xff]
              %1245 = vst [vmem:[%s1205 + $0x98] sm:$0xff] %v1244
              %v1246 = vld [vmem:[%s1204 + $0xa0] sm:$0xff]
              %1247 = vst [vmem:[%s1205 + $0xa0] sm:$0xff] %v1246
              %v1248 = vld [vmem:[%s1204 + $0xa8] sm:$0xff]
              %1249 = vst [vmem:[%s1205 + $0xa8] sm:$0xff] %v1248
              %v1250 = vld [vmem:[%s1204 + $0xb0] sm:$0xff]
              %1251 = vst [vmem:[%s1205 + $0xb0] sm:$0xff] %v1250
              %v1252 = vld [vmem:[%s1204 + $0xb8] sm:$0xff]
              %1253 = vst [vmem:[%s1205 + $0xb8] sm:$0xff] %v1252
              %v1254 = vld [vmem:[%s1204 + $0xc0] sm:$0xff]
              %1255 = vst [vmem:[%s1205 + $0xc0] sm:$0xff] %v1254
            $region41: #{my_net_forward.1} parent=35 // loop_footer
              %s1203 = sadd.s32 1, %s1199
            $region42: #{my_net_forward.1} parent=35 // loop_footer_branch
              %1198 = sbr.rel target = $region38
            $region43: #{my_net_forward.1} parent=35 // loop_exit
              _
          $region36: #{my_net_forward.1} parent=20 // pred_fallthru
            _
          // Predicated region
          $region44: #{my_net_forward.1} parent=20 // pred_check
            _
          $region45: #{my_net_forward.1} parent=20 // pred_check_branch
            %1257 = sbr.rel target = $region47
          $region46: #{my_net_forward.1} parent=20 // pred_region
            _
          $region47: #{my_net_forward.1} parent=20 // pred_fallthru
            _
        $region21: #{my_net_forward.1} parent=16 // pred_fallthru
          _
        // Predicated region
        $region22: #{my_net_forward.1} parent=16 // pred_check
          _
        $region23: #{my_net_forward.1} parent=16 // pred_check_branch
          %1136 = sbr.rel target = $region25
        $region24: #{my_net_forward.1} parent=16 // pred_region
          loop: start=0, step=1, limit=1
          $region26: #{my_net_forward.1} parent=24 // loop_pre_header
            _
          $region27: #{my_net_forward.1} parent=24 // loop_header
            %s1139 = sphi 0, %s1143
            %p1140 = scmp.ge.s32.totalorder %s1139, 1
            %s1144 = sphi [#allocation2], [#allocation2]
            %s1145 = sphi %s2, %s2
          $region28: #{my_net_forward.1} parent=24 // loop_header_branch
            %1142 = sbr.rel (%p1140) target = $region32
          $region29: #{my_net_forward.1} parent=24 // loop_body
            %v1146 = vld [vmem:[%s1144] sm:$0xff]
            %1147 = vst [vmem:[%s1145] sm:$0xff] %v1146
            %v1148 = vld [vmem:[%s1144 + $0x8] sm:$0xff]
            %1149 = vst [vmem:[%s1145 + $0x8] sm:$0xff] %v1148
            %v1150 = vld [vmem:[%s1144 + $0x10] sm:$0xff]
            %1151 = vst [vmem:[%s1145 + $0x10] sm:$0xff] %v1150
            %v1152 = vld [vmem:[%s1144 + $0x18] sm:$0xff]
            %1153 = vst [vmem:[%s1145 + $0x18] sm:$0xff] %v1152
            %v1154 = vld [vmem:[%s1144 + $0x20] sm:$0xff]
            %1155 = vst [vmem:[%s1145 + $0x20] sm:$0xff] %v1154
            %v1156 = vld [vmem:[%s1144 + $0x28] sm:$0xff]
            %1157 = vst [vmem:[%s1145 + $0x28] sm:$0xff] %v1156
            %v1158 = vld [vmem:[%s1144 + $0x30] sm:$0xff]
            %1159 = vst [vmem:[%s1145 + $0x30] sm:$0xff] %v1158
            %v1160 = vld [vmem:[%s1144 + $0x38] sm:$0xff]
            %1161 = vst [vmem:[%s1145 + $0x38] sm:$0xff] %v1160
            %v1162 = vld [vmem:[%s1144 + $0x40] sm:$0xff]
            %1163 = vst [vmem:[%s1145 + $0x40] sm:$0xff] %v1162
            %v1164 = vld [vmem:[%s1144 + $0x48] sm:$0xff]
            %1165 = vst [vmem:[%s1145 + $0x48] sm:$0xff] %v1164
            %v1166 = vld [vmem:[%s1144 + $0x50] sm:$0xff]
            %1167 = vst [vmem:[%s1145 + $0x50] sm:$0xff] %v1166
            %v1168 = vld [vmem:[%s1144 + $0x58] sm:$0xff]
            %1169 = vst [vmem:[%s1145 + $0x58] sm:$0xff] %v1168
            %v1170 = vld [vmem:[%s1144 + $0x60] sm:$0xff]
            %1171 = vst [vmem:[%s1145 + $0x60] sm:$0xff] %v1170
            %v1172 = vld [vmem:[%s1144 + $0x68] sm:$0xff]
            %1173 = vst [vmem:[%s1145 + $0x68] sm:$0xff] %v1172
            %v1174 = vld [vmem:[%s1144 + $0x70] sm:$0xff]
            %1175 = vst [vmem:[%s1145 + $0x70] sm:$0xff] %v1174
            %v1176 = vld [vmem:[%s1144 + $0x78] sm:$0xff]
            %1177 = vst [vmem:[%s1145 + $0x78] sm:$0xff] %v1176
            %v1178 = vld [vmem:[%s1144 + $0x80] sm:$0xff]
            %1179 = vst [vmem:[%s1145 + $0x80] sm:$0xff] %v1178
            %v1180 = vld [vmem:[%s1144 + $0x88] sm:$0xff]
            %1181 = vst [vmem:[%s1145 + $0x88] sm:$0xff] %v1180
            %v1182 = vld [vmem:[%s1144 + $0x90] sm:$0xff]
            %1183 = vst [vmem:[%s1145 + $0x90] sm:$0xff] %v1182
            %v1184 = vld [vmem:[%s1144 + $0x98] sm:$0xff]
            %1185 = vst [vmem:[%s1145 + $0x98] sm:$0xff] %v1184
            %v1186 = vld [vmem:[%s1144 + $0xa0] sm:$0xff]
            %1187 = vst [vmem:[%s1145 + $0xa0] sm:$0xff] %v1186
            %v1188 = vld [vmem:[%s1144 + $0xa8] sm:$0xff]
            %1189 = vst [vmem:[%s1145 + $0xa8] sm:$0xff] %v1188
            %v1190 = vld [vmem:[%s1144 + $0xb0] sm:$0xff]
            %1191 = vst [vmem:[%s1145 + $0xb0] sm:$0xff] %v1190
            %v1192 = vld [vmem:[%s1144 + $0xb8] sm:$0xff]
            %1193 = vst [vmem:[%s1145 + $0xb8] sm:$0xff] %v1192
            %v1194 = vld [vmem:[%s1144 + $0xc0] sm:$0xff]
            %1195 = vst [vmem:[%s1145 + $0xc0] sm:$0xff] %v1194
          $region30: #{my_net_forward.1} parent=24 // loop_footer
            %s1143 = sadd.s32 1, %s1139
          $region31: #{my_net_forward.1} parent=24 // loop_footer_branch
            %1138 = sbr.rel target = $region27
          $region32: #{my_net_forward.1} parent=24 // loop_exit
            _
        $region25: #{my_net_forward.1} parent=16 // pred_fallthru
          _
      $region17: #{my_net_forward.1} parent=12 // pred_fallthru
        _
      %1258 = vnop
    $region13: #{my_net_forward.1} parent=1 // pred_fallthru
      _
    // Predicated region
    $region48: #{my_net_forward.1} parent=1 // pred_check
      _
    $region49: #{my_net_forward.1} parent=1 // pred_check_branch
      %1260 = sbr.rel (0) target = $region51
    $region50: #{my_net_forward.1} parent=1 // pred_region
      _
    $region51: #{my_net_forward.1} parent=1 // pred_fallthru
      _

</llo_original>
